<compile_context>
chip_gen: v7x
topology: tpu7x:2x2x1
jax: 0.10.0
libtpu: 0.0.40
codegen_flags: <defaults>
</compile_context>

<pallas_src>
import functools

import jax
import jax.numpy as jnp
from jax.experimental import pallas as pl
from jax.experimental.pallas import tpu as pltpu


def _round_up(x, m):
    return (x + m - 1) // m * m


def ffn_kernel(x_ref, w1_ref, b1_ref, w2_ref, b2_ref, gamma_ref, beta_ref,
               out_ref, *, eps: float, d_in: int):
    """One (TM, Dp) token tile. x/w1/w2 are bf16; biases / LN params are f32."""
    x_bf = x_ref[...]                              # bf16, straight into the MXU

    # w_1 + ReLU  (bf16 MXU matmul, f32 accumulate)
    h = jnp.dot(x_bf, w1_ref[...], preferred_element_type=jnp.float32)
    h = jnp.maximum(h + b1_ref[...], 0.0)

    # w_2  (cast the f32 intermediate back to bf16 for the MXU)
    y = jnp.dot(h.astype(jnp.bfloat16), w2_ref[...],
                preferred_element_type=jnp.float32) + b2_ref[...]

    # TODO(synk): dropout is identity in eval/inference; training-mode dropout
    # (pltpu.prng_random_bits mask) is not implemented here.

    # Residual add + LayerNorm in f32.  Padded feature lanes of z are exactly
    # zero (zero-padded x, zero w2 columns, zero b2), so sums over all lanes
    # divided by the *real* d_in give the correct statistics.
    z = y + x_bf.astype(jnp.float32)

    d_pad = z.shape[-1]
    inv_d = 1.0 / d_in
    mean = jnp.sum(z, axis=-1, keepdims=True) * inv_d
    centered = z - mean
    if d_pad != d_in:
        # Mask padded lanes so they do not corrupt the variance.
        lane = jax.lax.broadcasted_iota(jnp.int32, z.shape, dimension=1)
        centered = jnp.where(lane < d_in, centered, 0.0)
    var = jnp.sum(centered * centered, axis=-1, keepdims=True) * inv_d
    inv = jax.lax.rsqrt(var + eps)
    out = centered * inv * gamma_ref[...] + beta_ref[...]

    out_ref[...] = out.astype(out_ref.dtype)


def positionwise_feed_forward(x, w1, b1, w2, b2, gamma, beta, *, eps=1e-6,
                              row_tile=256, out_dtype=None):
    """x: (B, S, d_in). Weights as [d_in, d_hid] / [d_hid, d_in] (x @ W + b)."""
    B, S, d_in = x.shape
    d_hid = w1.shape[1]
    assert w1.shape == (d_in, d_hid) and w2.shape == (d_hid, d_in)
    out_dtype = out_dtype if out_dtype is not None else x.dtype

    N = B * S
    # Large row tile for MXU occupancy / per-step overhead amortization, but do
    # not overshoot tiny inputs.  Must be a multiple of 8 (sublane).
    tm = _round_up(min(row_tile, _round_up(N, 8)), 8)
    n_pad = _round_up(N, tm)
    dp = _round_up(d_in, 128)      # lane-dense feature dim
    hp = _round_up(d_hid, 128)     # lane-dense hidden dim

    # bf16 operands for the MXU; biases / LayerNorm params stay f32.
    x2d = jnp.zeros((n_pad, dp), jnp.bfloat16).at[:N, :d_in].set(
        x.reshape(N, d_in).astype(jnp.bfloat16))
    w1p = jnp.zeros((dp, hp), jnp.bfloat16).at[:d_in, :d_hid].set(
        w1.astype(jnp.bfloat16))
    w2p = jnp.zeros((hp, dp), jnp.bfloat16).at[:d_hid, :d_in].set(
        w2.astype(jnp.bfloat16))
    b1p = jnp.zeros((1, hp), jnp.float32).at[0, :d_hid].set(b1.astype(jnp.float32))
    b2p = jnp.zeros((1, dp), jnp.float32).at[0, :d_in].set(b2.astype(jnp.float32))
    gp = jnp.zeros((1, dp), jnp.float32).at[0, :d_in].set(gamma.astype(jnp.float32))
    bp = jnp.zeros((1, dp), jnp.float32).at[0, :d_in].set(beta.astype(jnp.float32))

    grid = (n_pad // tm,)
    out_itemsize = jnp.dtype(out_dtype).itemsize

    # Explicit VMEM budget: resident bf16 weights + double-buffered x/out tiles
    # + f32 intermediates, with headroom.  (On v7x re-derive against 64 MiB/TC.)
    weight_bytes = 2 * dp * hp * 2 + (hp + 3 * dp) * 4
    io_bytes = 2 * tm * dp * 2 + 2 * tm * dp * out_itemsize
    interm_bytes = tm * hp * 4 + 2 * tm * dp * 4
    vmem_limit = max(int(1.5 * (weight_bytes + io_bytes + interm_bytes)), 32 << 20)

    cost = pl.CostEstimate(
        flops=4 * n_pad * dp * hp,
        transcendentals=n_pad,
        bytes_accessed=n_pad * dp * (2 + out_itemsize) + weight_bytes,
    )

    def _invariant(shape, mode):
        if mode is None:
            return pl.BlockSpec(shape, lambda i: (0, 0))
        return pl.BlockSpec(shape, lambda i: (0, 0), pipeline_mode=mode)

    def _run(weight_mode):
        in_specs = [
            pl.BlockSpec((tm, dp), lambda i: (i, 0)),     # x tile (streamed)
            _invariant((dp, hp), weight_mode),            # w1 (resident)
            _invariant((1, hp), weight_mode),             # b1
            _invariant((hp, dp), weight_mode),            # w2 (resident)
            _invariant((1, dp), weight_mode),             # b2
            _invariant((1, dp), weight_mode),             # gamma
            _invariant((1, dp), weight_mode),             # beta
        ]
        return pl.pallas_call(
            functools.partial(ffn_kernel, eps=eps, d_in=d_in),
            out_shape=jax.ShapeDtypeStruct((n_pad, dp), out_dtype),
            grid_spec=pltpu.PrefetchScalarGridSpec(
                num_scalar_prefetch=0,
                grid=grid,
                in_specs=in_specs,
                out_specs=pl.BlockSpec((tm, dp), lambda i: (i, 0)),
            ),
            compiler_params=pltpu.CompilerParams(
                dimension_semantics=("parallel",),
                vmem_limit_bytes=vmem_limit),
            cost_estimate=cost,
        )(x2d, w1p, b1p, w2p, b2p, gp, bp)

    try:
        # Grid-invariant operands single-buffered so weights are not 2x'd in VMEM.
        out2d = _run(pl.Buffered(buffer_count=1))
    except Exception:
        # Fallback for jax versions where single-buffered pipeline_mode is not
        # supported on a top-level pallas_call: accept default double-buffering.
        out2d = _run(None)

    return out2d[:N, :d_in].reshape(B, S, d_in)


if __name__ == "__main__":
    # Small shapes consistent with the module's forward: (B, S, d_in).
    B, S, d_in, d_hid = 2, 8, 32, 64

    key = jax.random.PRNGKey(0)
    kx, kw1, kb1, kw2, kb2 = jax.random.split(key, 5)

    x = jax.random.normal(kx, (B, S, d_in), dtype=jnp.float32)

    # Deterministic synthetic parameters (shapes from nn.Linear / nn.LayerNorm).
    w1 = jax.random.normal(kw1, (d_in, d_hid), dtype=jnp.float32) * 0.1
    b1 = jax.random.normal(kb1, (d_hid,), dtype=jnp.float32) * 0.1
    w2 = jax.random.normal(kw2, (d_hid, d_in), dtype=jnp.float32) * 0.1
    b2 = jax.random.normal(kb2, (d_in,), dtype=jnp.float32) * 0.1
    gamma = jnp.ones((d_in,), dtype=jnp.float32)
    beta = jnp.zeros((d_in,), dtype=jnp.float32)

    out = positionwise_feed_forward(x, w1, b1, w2, b2, gamma, beta)
    out = jax.block_until_ready(out)

    # Pure-JAX f32 reference (torch semantics).  Kernel uses bf16 MXU operands,
    # so tolerances are loosened accordingly.
    h_ref = jnp.maximum(x @ w1 + b1, 0.0)
    y_ref = h_ref @ w2 + b2 + x
    mu = jnp.mean(y_ref, axis=-1, keepdims=True)
    var = jnp.mean((y_ref - mu) ** 2, axis=-1, keepdims=True)
    ref = (y_ref - mu) / jnp.sqrt(var + 1e-6) * gamma + beta

    assert out.shape == (B, S, d_in)
    assert bool(jnp.all(jnp.isfinite(out)))
    assert jnp.allclose(out, ref, atol=5e-2, rtol=5e-2), (
        f"mismatch vs reference: max abs diff {jnp.max(jnp.abs(out - ref))}")

    print("KERNEL_OK")
</pallas_src>

<mosaic_0001>
module attributes {stable_mosaic.version = 11 : i64} {
  func.func @ffn_kernel(%arg0: i32, %arg1: memref<16x128xbf16, #tpu.memory_space<vmem>>, %arg2: memref<128x128xbf16, #tpu.memory_space<vmem>>, %arg3: memref<1x128xf32, #tpu.memory_space<vmem>>, %arg4: memref<128x128xbf16, #tpu.memory_space<vmem>>, %arg5: memref<1x128xf32, #tpu.memory_space<vmem>>, %arg6: memref<1x128xf32, #tpu.memory_space<vmem>>, %arg7: memref<1x128xf32, #tpu.memory_space<vmem>>, %arg8: memref<16x128xf32, #tpu.memory_space<vmem>>) attributes {dimension_semantics = [#tpu.dimension_semantics<parallel>], iteration_bounds = array<i64: 1>, scalar_prefetch = 0 : i64, scratch_operands = 0 : i64, tpu.core_type = #tpu.core_type<tc>, window_params = [{transform_indices = @transform_0, window_bounds = array<i64: 16, 128>}, {pipeline_mode = #tpu.pipeline_mode<synchronous>, transform_indices = @transform_1, window_bounds = array<i64: 128, 128>}, {pipeline_mode = #tpu.pipeline_mode<synchronous>, transform_indices = @transform_2, window_bounds = array<i64: 1, 128>}, {pipeline_mode = #tpu.pipeline_mode<synchronous>, transform_indices = @transform_3, window_bounds = array<i64: 128, 128>}, {pipeline_mode = #tpu.pipeline_mode<synchronous>, transform_indices = @transform_4, window_bounds = array<i64: 1, 128>}, {pipeline_mode = #tpu.pipeline_mode<synchronous>, transform_indices = @transform_5, window_bounds = array<i64: 1, 128>}, {pipeline_mode = #tpu.pipeline_mode<synchronous>, transform_indices = @transform_6, window_bounds = array<i64: 1, 128>}, {transform_indices = @transform_7, window_bounds = array<i64: 16, 128>}]} {
    %c0 = arith.constant 0 : index
    %c0_0 = arith.constant 0 : index
    %0 = vector.load %arg1[%c0, %c0_0] : memref<16x128xbf16, #tpu.memory_space<vmem>>, vector<16x128xbf16>
    %c0_1 = arith.constant 0 : index
    %c0_2 = arith.constant 0 : index
    %1 = vector.load %arg2[%c0_1, %c0_2] : memref<128x128xbf16, #tpu.memory_space<vmem>>, vector<128x128xbf16>
    %cst = arith.constant dense<0.000000e+00> : vector<16x128xf32>
    %2 = tpu.matmul %0, %1, %cst {dimension_numbers = #tpu.dot_dimension_numbers<[1], [0], [0], [1], [0, 0, 1, 1], [], []>} : vector<16x128xbf16>, vector<128x128xbf16>, vector<16x128xf32> -> vector<16x128xf32>
    %c0_3 = arith.constant 0 : index
    %c0_4 = arith.constant 0 : index
    %3 = vector.load %arg3[%c0_3, %c0_4] : memref<1x128xf32, #tpu.memory_space<vmem>>, vector<1x128xf32>
    %4 = vector.broadcast %3 : vector<1x128xf32> to vector<16x128xf32>
    %5 = arith.addf %2, %4 : vector<16x128xf32>
    %cst_5 = arith.constant 0.000000e+00 : f32
    %6 = vector.broadcast %cst_5 : f32 to vector<16x128xf32>
    %7 = arith.maximumf %5, %6 : vector<16x128xf32>
    %8 = arith.truncf %7 : vector<16x128xf32> to vector<16x128xbf16>
    %c0_6 = arith.constant 0 : index
    %c0_7 = arith.constant 0 : index
    %9 = vector.load %arg4[%c0_6, %c0_7] : memref<128x128xbf16, #tpu.memory_space<vmem>>, vector<128x128xbf16>
    %cst_8 = arith.constant dense<0.000000e+00> : vector<16x128xf32>
    %10 = tpu.matmul %8, %9, %cst_8 {dimension_numbers = #tpu.dot_dimension_numbers<[1], [0], [0], [1], [0, 0, 1, 1], [], []>} : vector<16x128xbf16>, vector<128x128xbf16>, vector<16x128xf32> -> vector<16x128xf32>
    %c0_9 = arith.constant 0 : index
    %c0_10 = arith.constant 0 : index
    %11 = vector.load %arg5[%c0_9, %c0_10] : memref<1x128xf32, #tpu.memory_space<vmem>>, vector<1x128xf32>
    %12 = vector.broadcast %11 : vector<1x128xf32> to vector<16x128xf32>
    %13 = arith.addf %10, %12 : vector<16x128xf32>
    %14 = arith.extf %0 : vector<16x128xbf16> to vector<16x128xf32>
    %15 = arith.addf %13, %14 : vector<16x128xf32>
    %cst_11 = arith.constant dense<0.000000e+00> : vector<16xf32>
    %16 = vector.multi_reduction <add>, %15, %cst_11 [1] : vector<16x128xf32> to vector<16xf32>
    %17 = vector.shape_cast %16 : vector<16xf32> to vector<16x1xf32>
    %cst_12 = arith.constant 3.125000e-02 : f32
    %18 = vector.broadcast %cst_12 : f32 to vector<16x1xf32>
    %19 = arith.mulf %17, %18 : vector<16x1xf32>
    %20 = vector.broadcast %19 : vector<16x1xf32> to vector<16x128xf32>
    %21 = arith.subf %15, %20 : vector<16x128xf32>
    %22 = tpu.iota {dimensions = array<i32: 1>} : vector<16x128xi32>
    %c32_i32 = arith.constant 32 : i32
    %23 = vector.broadcast %c32_i32 : i32 to vector<16x128xi32>
    %24 = arith.cmpi slt, %22, %23 : vector<16x128xi32>
    %cst_13 = arith.constant 0.000000e+00 : f32
    %25 = vector.broadcast %cst_13 : f32 to vector<16x128xf32>
    %26 = arith.select %24, %21, %25 : vector<16x128xi1>, vector<16x128xf32>
    %27 = arith.mulf %26, %26 : vector<16x128xf32>
    %cst_14 = arith.constant dense<0.000000e+00> : vector<16xf32>
    %28 = vector.multi_reduction <add>, %27, %cst_14 [1] : vector<16x128xf32> to vector<16xf32>
    %29 = vector.shape_cast %28 : vector<16xf32> to vector<16x1xf32>
    %cst_15 = arith.constant 3.125000e-02 : f32
    %30 = vector.broadcast %cst_15 : f32 to vector<16x1xf32>
    %31 = arith.mulf %29, %30 : vector<16x1xf32>
    %cst_16 = arith.constant 9.99999997E-7 : f32
    %32 = vector.broadcast %cst_16 : f32 to vector<16x1xf32>
    %33 = arith.addf %31, %32 : vector<16x1xf32>
    %34 = math.rsqrt %33 : vector<16x1xf32>
    %35 = vector.broadcast %34 : vector<16x1xf32> to vector<16x128xf32>
    %36 = arith.mulf %26, %35 : vector<16x128xf32>
    %c0_17 = arith.constant 0 : index
    %c0_18 = arith.constant 0 : index
    %37 = vector.load %arg6[%c0_17, %c0_18] : memref<1x128xf32, #tpu.memory_space<vmem>>, vector<1x128xf32>
    %38 = vector.broadcast %37 : vector<1x128xf32> to vector<16x128xf32>
    %39 = arith.mulf %36, %38 : vector<16x128xf32>
    %c0_19 = arith.constant 0 : index
    %c0_20 = arith.constant 0 : index
    %40 = vector.load %arg7[%c0_19, %c0_20] : memref<1x128xf32, #tpu.memory_space<vmem>>, vector<1x128xf32>
    %41 = vector.broadcast %40 : vector<1x128xf32> to vector<16x128xf32>
    %42 = arith.addf %39, %41 : vector<16x128xf32>
    %c0_21 = arith.constant 0 : index
    %c0_22 = arith.constant 0 : index
    %43 = vector.load %arg8[%c0_21, %c0_22] : memref<16x128xf32, #tpu.memory_space<vmem>>, vector<16x128xf32>
    tpu.vector_store %arg8[%c0_21, %c0_22], %42 {strides = array<i32>} : memref<16x128xf32, #tpu.memory_space<vmem>>, vector<16x128xf32>,
    return
  }
  func.func @transform_0(%arg0: i32) -> (i32, i32) {
    %c0_i32 = arith.constant 0 : i32
    %c0_i32_0 = arith.constant 0 : i32
    return %arg0, %c0_i32 : i32, i32
  }
  func.func @transform_1(%arg0: i32) -> (i32, i32) {
    %c0_i32 = arith.constant 0 : i32
    %c0_i32_0 = arith.constant 0 : i32
    %c0_i32_1 = arith.constant 0 : i32
    return %c0_i32, %c0_i32_0 : i32, i32
  }
  func.func @transform_2(%arg0: i32) -> (i32, i32) {
    %c0_i32 = arith.constant 0 : i32
    %c0_i32_0 = arith.constant 0 : i32
    %c0_i32_1 = arith.constant 0 : i32
    return %c0_i32, %c0_i32_0 : i32, i32
  }
  func.func @transform_3(%arg0: i32) -> (i32, i32) {
    %c0_i32 = arith.constant 0 : i32
    %c0_i32_0 = arith.constant 0 : i32
    %c0_i32_1 = arith.constant 0 : i32
    return %c0_i32, %c0_i32_0 : i32, i32
  }
  func.func @transform_4(%arg0: i32) -> (i32, i32) {
    %c0_i32 = arith.constant 0 : i32
    %c0_i32_0 = arith.constant 0 : i32
    %c0_i32_1 = arith.constant 0 : i32
    return %c0_i32, %c0_i32_0 : i32, i32
  }
  func.func @transform_5(%arg0: i32) -> (i32, i32) {
    %c0_i32 = arith.constant 0 : i32
    %c0_i32_0 = arith.constant 0 : i32
    %c0_i32_1 = arith.constant 0 : i32
    return %c0_i32, %c0_i32_0 : i32, i32
  }
  func.func @transform_6(%arg0: i32) -> (i32, i32) {
    %c0_i32 = arith.constant 0 : i32
    %c0_i32_0 = arith.constant 0 : i32
    %c0_i32_1 = arith.constant 0 : i32
    return %c0_i32, %c0_i32_0 : i32, i32
  }
  func.func @transform_7(%arg0: i32) -> (i32, i32) {
    %c0_i32 = arith.constant 0 : i32
    %c0_i32_0 = arith.constant 0 : i32
    return %arg0, %c0_i32 : i32, i32
  }
}

module attributes {stable_mosaic.version = 11 : i64} {
  func.func @ffn_kernel(%arg0: i32, %arg1: memref<16x128xbf16, #tpu.memory_space<vmem>>, %arg2: memref<128x128xbf16, #tpu.memory_space<vmem>>, %arg3: memref<1x128xf32, #tpu.memory_space<vmem>>, %arg4: memref<128x128xbf16, #tpu.memory_space<vmem>>, %arg5: memref<1x128xf32, #tpu.memory_space<vmem>>, %arg6: memref<1x128xf32, #tpu.memory_space<vmem>>, %arg7: memref<1x128xf32, #tpu.memory_space<vmem>>, %arg8: memref<16x128xf32, #tpu.memory_space<vmem>>) attributes {dimension_semantics = [#tpu.dimension_semantics<parallel>], iteration_bounds = array<i64: 1>, scalar_prefetch = 0 : i64, scratch_operands = 0 : i64, tpu.core_type = #tpu.core_type<tc>, window_params = [{transform_indices = @transform_0, window_bounds = array<i64: 16, 128>}, {pipeline_mode = #tpu.pipeline_mode<synchronous>, transform_indices = @transform_1, window_bounds = array<i64: 128, 128>}, {pipeline_mode = #tpu.pipeline_mode<synchronous>, transform_indices = @transform_2, window_bounds = array<i64: 1, 128>}, {pipeline_mode = #tpu.pipeline_mode<synchronous>, transform_indices = @transform_3, window_bounds = array<i64: 128, 128>}, {pipeline_mode = #tpu.pipeline_mode<synchronous>, transform_indices = @transform_4, window_bounds = array<i64: 1, 128>}, {pipeline_mode = #tpu.pipeline_mode<synchronous>, transform_indices = @transform_5, window_bounds = array<i64: 1, 128>}, {pipeline_mode = #tpu.pipeline_mode<synchronous>, transform_indices = @transform_6, window_bounds = array<i64: 1, 128>}, {transform_indices = @transform_7, window_bounds = array<i64: 16, 128>}]} {
    %c0 = arith.constant 0 : index
    %c0_0 = arith.constant 0 : index
    %0 = vector.load %arg1[%c0, %c0_0] : memref<16x128xbf16, #tpu.memory_space<vmem>>, vector<16x128xbf16>
    %c0_1 = arith.constant 0 : index
    %c0_2 = arith.constant 0 : index
    %1 = vector.load %arg2[%c0_1, %c0_2] : memref<128x128xbf16, #tpu.memory_space<vmem>>, vector<128x128xbf16>
    %cst = arith.constant dense<0.000000e+00> : vector<16x128xf32>
    %2 = tpu.matmul %0, %1, %cst {dimension_numbers = #tpu.dot_dimension_numbers<[1], [0], [0], [1], [0, 0, 1, 1], [], []>} : vector<16x128xbf16>, vector<128x128xbf16>, vector<16x128xf32> -> vector<16x128xf32>
    %c0_3 = arith.constant 0 : index
    %c0_4 = arith.constant 0 : index
    %3 = vector.load %arg3[%c0_3, %c0_4] : memref<1x128xf32, #tpu.memory_space<vmem>>, vector<1x128xf32>
    %4 = vector.broadcast %3 : vector<1x128xf32> to vector<16x128xf32>
    %5 = arith.addf %2, %4 : vector<16x128xf32>
    %cst_5 = arith.constant 0.000000e+00 : f32
    %6 = vector.broadcast %cst_5 : f32 to vector<16x128xf32>
    %7 = arith.maximumf %5, %6 : vector<16x128xf32>
    %8 = arith.truncf %7 : vector<16x128xf32> to vector<16x128xbf16>
    %c0_6 = arith.constant 0 : index
    %c0_7 = arith.constant 0 : index
    %9 = vector.load %arg4[%c0_6, %c0_7] : memref<128x128xbf16, #tpu.memory_space<vmem>>, vector<128x128xbf16>
    %cst_8 = arith.constant dense<0.000000e+00> : vector<16x128xf32>
    %10 = tpu.matmul %8, %9, %cst_8 {dimension_numbers = #tpu.dot_dimension_numbers<[1], [0], [0], [1], [0, 0, 1, 1], [], []>} : vector<16x128xbf16>, vector<128x128xbf16>, vector<16x128xf32> -> vector<16x128xf32>
    %c0_9 = arith.constant 0 : index
    %c0_10 = arith.constant 0 : index
    %11 = vector.load %arg5[%c0_9, %c0_10] : memref<1x128xf32, #tpu.memory_space<vmem>>, vector<1x128xf32>
    %12 = vector.broadcast %11 : vector<1x128xf32> to vector<16x128xf32>
    %13 = arith.addf %10, %12 : vector<16x128xf32>
    %14 = arith.extf %0 : vector<16x128xbf16> to vector<16x128xf32>
    %15 = arith.addf %13, %14 : vector<16x128xf32>
    %cst_11 = arith.constant dense<0.000000e+00> : vector<16xf32>
    %16 = vector.multi_reduction <add>, %15, %cst_11 [1] : vector<16x128xf32> to vector<16xf32>
    %17 = vector.shape_cast %16 : vector<16xf32> to vector<16x1xf32>
    %cst_12 = arith.constant 3.125000e-02 : f32
    %18 = vector.broadcast %cst_12 : f32 to vector<16x1xf32>
    %19 = arith.mulf %17, %18 : vector<16x1xf32>
    %20 = vector.broadcast %19 : vector<16x1xf32> to vector<16x128xf32>
    %21 = arith.subf %15, %20 : vector<16x128xf32>
    %22 = tpu.iota {dimensions = array<i32: 1>} : vector<16x128xi32>
    %c32_i32 = arith.constant 32 : i32
    %23 = vector.broadcast %c32_i32 : i32 to vector<16x128xi32>
    %24 = arith.cmpi slt, %22, %23 : vector<16x128xi32>
    %cst_13 = arith.constant 0.000000e+00 : f32
    %25 = vector.broadcast %cst_13 : f32 to vector<16x128xf32>
    %26 = arith.select %24, %21, %25 : vector<16x128xi1>, vector<16x128xf32>
    %27 = arith.mulf %26, %26 : vector<16x128xf32>
    %cst_14 = arith.constant dense<0.000000e+00> : vector<16xf32>
    %28 = vector.multi_reduction <add>, %27, %cst_14 [1] : vector<16x128xf32> to vector<16xf32>
    %29 = vector.shape_cast %28 : vector<16xf32> to vector<16x1xf32>
    %cst_15 = arith.constant 3.125000e-02 : f32
    %30 = vector.broadcast %cst_15 : f32 to vector<16x1xf32>
    %31 = arith.mulf %29, %30 : vector<16x1xf32>
    %cst_16 = arith.constant 9.99999997E-7 : f32
    %32 = vector.broadcast %cst_16 : f32 to vector<16x1xf32>
    %33 = arith.addf %31, %32 : vector<16x1xf32>
    %34 = math.rsqrt %33 : vector<16x1xf32>
    %35 = vector.broadcast %34 : vector<16x1xf32> to vector<16x128xf32>
    %36 = arith.mulf %26, %35 : vector<16x128xf32>
    %c0_17 = arith.constant 0 : index
    %c0_18 = arith.constant 0 : index
    %37 = vector.load %arg6[%c0_17, %c0_18] : memref<1x128xf32, #tpu.memory_space<vmem>>, vector<1x128xf32>
    %38 = vector.broadcast %37 : vector<1x128xf32> to vector<16x128xf32>
    %39 = arith.mulf %36, %38 : vector<16x128xf32>
    %c0_19 = arith.constant 0 : index
    %c0_20 = arith.constant 0 : index
    %40 = vector.load %arg7[%c0_19, %c0_20] : memref<1x128xf32, #tpu.memory_space<vmem>>, vector<1x128xf32>
    %41 = vector.broadcast %40 : vector<1x128xf32> to vector<16x128xf32>
    %42 = arith.addf %39, %41 : vector<16x128xf32>
    %c0_21 = arith.constant 0 : index
    %c0_22 = arith.constant 0 : index
    %43 = vector.load %arg8[%c0_21, %c0_22] : memref<16x128xf32, #tpu.memory_space<vmem>>, vector<16x128xf32>
    tpu.vector_store %arg8[%c0_21, %c0_22], %42 {strides = array<i32>} : memref<16x128xf32, #tpu.memory_space<vmem>>, vector<16x128xf32>,
    return
  }
  func.func @transform_0(%arg0: i32) -> (i32, i32) {
    %c0_i32 = arith.constant 0 : i32
    %c0_i32_0 = arith.constant 0 : i32
    return %arg0, %c0_i32 : i32, i32
  }
  func.func @transform_1(%arg0: i32) -> (i32, i32) {
    %c0_i32 = arith.constant 0 : i32
    %c0_i32_0 = arith.constant 0 : i32
    %c0_i32_1 = arith.constant 0 : i32
    return %c0_i32, %c0_i32_0 : i32, i32
  }
  func.func @transform_2(%arg0: i32) -> (i32, i32) {
    %c0_i32 = arith.constant 0 : i32
    %c0_i32_0 = arith.constant 0 : i32
    %c0_i32_1 = arith.constant 0 : i32
    return %c0_i32, %c0_i32_0 : i32, i32
  }
  func.func @transform_3(%arg0: i32) -> (i32, i32) {
    %c0_i32 = arith.constant 0 : i32
    %c0_i32_0 = arith.constant 0 : i32
    %c0_i32_1 = arith.constant 0 : i32
    return %c0_i32, %c0_i32_0 : i32, i32
  }
  func.func @transform_4(%arg0: i32) -> (i32, i32) {
    %c0_i32 = arith.constant 0 : i32
    %c0_i32_0 = arith.constant 0 : i32
    %c0_i32_1 = arith.constant 0 : i32
    return %c0_i32, %c0_i32_0 : i32, i32
  }
  func.func @transform_5(%arg0: i32) -> (i32, i32) {
    %c0_i32 = arith.constant 0 : i32
    %c0_i32_0 = arith.constant 0 : i32
    %c0_i32_1 = arith.constant 0 : i32
    return %c0_i32, %c0_i32_0 : i32, i32
  }
  func.func @transform_6(%arg0: i32) -> (i32, i32) {
    %c0_i32 = arith.constant 0 : i32
    %c0_i32_0 = arith.constant 0 : i32
    %c0_i32_1 = arith.constant 0 : i32
    return %c0_i32, %c0_i32_0 : i32, i32
  }
  func.func @transform_7(%arg0: i32) -> (i32, i32) {
    %c0_i32 = arith.constant 0 : i32
    %c0_i32_0 = arith.constant 0 : i32
    return %arg0, %c0_i32 : i32, i32
  }
}

</mosaic_0001>

<llo_original>
// kernel: tpu_custom_call.1
$region0: #{tpu_custom_call.1}
  #allocation0 [shape = 'u32[]', space=smem, size = 0x4, offset = 0x4, fixed_abs, tag = 'smem constant byte address 0x4 - core index']
  #allocation1 [shape = 'u32[144,128]{1,0:T(1,128)}', space=vmem, size = 0x12000, scoped, tag = 'internal scratch']
  %s0 = inlined_call_operand.hbm [shape: bf16[16,128], index: 0, kind: input, shape index: {}]
  %s1 = inlined_call_operand.hbm [shape: bf16[128,128], index: 1, kind: input, shape index: {}]
  %s2 = inlined_call_operand.vmem [shape: f32[1,128], index: 2, kind: input, shape index: {}]
  %s3 = inlined_call_operand.hbm [shape: bf16[128,128], index: 3, kind: input, shape index: {}]
  %s4 = inlined_call_operand.vmem [shape: f32[1,128], index: 4, kind: input, shape index: {}]
  %s5 = inlined_call_operand.vmem [shape: f32[1,128], index: 5, kind: input, shape index: {}]
  %s6 = inlined_call_operand.vmem [shape: f32[1,128], index: 6, kind: input, shape index: {}]
  %s7 = inlined_call_operand.hbm [shape: f32[16,128], index: 7, kind: output, shape index: {}]
  %s8 = sld [smem:[#allocation0]]
  $region50: #{tpu_custom_call.1} parent=0
    _
  %s10 = ssub.s32 1, %s8
  %s11 = scalar_select 0, %s10, %s8
  $region1: #{tpu_custom_call.1} parent=0
    #allocation2 [shape = 'u8[4096]{0}', space=vmem, size = 0x1000, scoped, tag = 'input window, operand 0, single buffered']
    #allocation3 [shape = 's32[1]{0}', space=sflag, size = 0x4, scoped, tag = 'scoped memory for tpu_custom_call.1']
    #allocation4 [shape = 's32[1]{0}', space=sflag, size = 0x4, scoped, tag = 'scoped memory for tpu_custom_call.1']
    #allocation5 [shape = 'u8[32768]{0}', space=vmem, size = 0x8000, scoped, tag = 'input window, operand 1, single buffered']
    #allocation6 [shape = 's32[1]{0}', space=sflag, size = 0x4, scoped, tag = 'scoped memory for tpu_custom_call.1']
    #allocation7 [shape = 'u8[32768]{0}', space=vmem, size = 0x8000, scoped, tag = 'input window, operand 3, single buffered']
    #allocation8 [shape = 'u8[8192]{0}', space=vmem, size = 0x2000, scoped, tag = 'output window, operand 0, single buffered']
    %12 = vsyncpa [#allocation3], 0
    %13 = vsyncpa [#allocation6], 0
    %14 = vsyncpa [#allocation4], 0
    // Predicated region
    $region2: #{tpu_custom_call.1} parent=1 // pred_check
      _
    $region3: #{tpu_custom_call.1} parent=1 // pred_check_branch
      %16 = sbr.rel (0) target = $region5
    $region4: #{tpu_custom_call.1} parent=1 // pred_region
      %s18 = ssub.s32 128, 128
      %19 = vsyncadd [#allocation3], %s18
      %s20 = sshll.u32 [#allocation2], 4
      %s21 = int_to_ptr.vmem [resolvable:$true] %s20
      %26 = dma.hbm_to_vmem [thread:$0]  %s0, 128, %s21, [#allocation3], 64, 64, 4
    $region5: #{tpu_custom_call.1} parent=1 // pred_fallthru
      _
    // Predicated region
    $region6: #{tpu_custom_call.1} parent=1 // pred_check
      _
    $region7: #{tpu_custom_call.1} parent=1 // pred_check_branch
      %28 = sbr.rel (0) target = $region9
    $region8: #{tpu_custom_call.1} parent=1 // pred_region
      %s30 = ssub.s32 1024, 1024
      %31 = vsyncadd [#allocation6], %s30
      %s32 = sshll.u32 [#allocation5], 4
      %s33 = int_to_ptr.vmem [resolvable:$true] %s32
      %38 = dma.hbm_to_vmem [thread:$0]  %s1, 1024, %s33, [#allocation6], 64, 64, 4
    $region9: #{tpu_custom_call.1} parent=1 // pred_fallthru
      _
    // Predicated region
    $region10: #{tpu_custom_call.1} parent=1 // pred_check
      _
    $region11: #{tpu_custom_call.1} parent=1 // pred_check_branch
      %40 = sbr.rel (0) target = $region13
    $region12: #{tpu_custom_call.1} parent=1 // pred_region
      _
    $region13: #{tpu_custom_call.1} parent=1 // pred_fallthru
      _
    // Predicated region
    $region14: #{tpu_custom_call.1} parent=1 // pred_check
      _
    $region15: #{tpu_custom_call.1} parent=1 // pred_check_branch
      %42 = sbr.rel (0) target = $region17
    $region16: #{tpu_custom_call.1} parent=1 // pred_region
      %s44 = ssub.s32 1024, 1024
      %45 = vsyncadd [#allocation6], %s44
      %s46 = sshll.u32 [#allocation7], 4
      %s47 = int_to_ptr.vmem [resolvable:$true] %s46
      %52 = dma.hbm_to_vmem [thread:$0]  %s3, 1024, %s47, [#allocation6], 64, 64, 4
    $region17: #{tpu_custom_call.1} parent=1 // pred_fallthru
      _
    // Predicated region
    $region18: #{tpu_custom_call.1} parent=1 // pred_check
      _
    $region19: #{tpu_custom_call.1} parent=1 // pred_check_branch
      %54 = sbr.rel (0) target = $region21
    $region20: #{tpu_custom_call.1} parent=1 // pred_region
      _
    $region21: #{tpu_custom_call.1} parent=1 // pred_fallthru
      _
    // Predicated region
    $region22: #{tpu_custom_call.1} parent=1 // pred_check
      _
    $region23: #{tpu_custom_call.1} parent=1 // pred_check_branch
      %56 = sbr.rel (0) target = $region25
    $region24: #{tpu_custom_call.1} parent=1 // pred_region
      _
    $region25: #{tpu_custom_call.1} parent=1 // pred_fallthru
      _
    // Predicated region
    $region26: #{tpu_custom_call.1} parent=1 // pred_check
      _
    $region27: #{tpu_custom_call.1} parent=1 // pred_check_branch
      %58 = sbr.rel (0) target = $region29
    $region28: #{tpu_custom_call.1} parent=1 // pred_region
      _
    $region29: #{tpu_custom_call.1} parent=1 // pred_fallthru
      _
    // Predicated region
    $region30: #{tpu_custom_call.1} parent=1 // pred_check
      _
    $region31: #{tpu_custom_call.1} parent=1 // pred_check_branch
      %60 = sbr.rel (0) target = $region33
    $region32: #{tpu_custom_call.1} parent=1 // pred_region
      %61 = dma.done [#allocation3], 128
    $region33: #{tpu_custom_call.1} parent=1 // pred_fallthru
      _
    // Predicated region
    $region34: #{tpu_custom_call.1} parent=1 // pred_check
      _
    $region35: #{tpu_custom_call.1} parent=1 // pred_check_branch
      %63 = sbr.rel (0) target = $region37
    $region36: #{tpu_custom_call.1} parent=1 // pred_region
      %64 = dma.done [#allocation6], 1024
    $region37: #{tpu_custom_call.1} parent=1 // pred_fallthru
      _
    // Predicated region
    $region38: #{tpu_custom_call.1} parent=1 // pred_check
      _
    $region39: #{tpu_custom_call.1} parent=1 // pred_check_branch
      %66 = sbr.rel (0) target = $region41
    $region40: #{tpu_custom_call.1} parent=1 // pred_region
      %67 = dma.done [#allocation6], 1024
    $region41: #{tpu_custom_call.1} parent=1 // pred_fallthru
      _
    %v69 = vld [vmem:[#allocation2] sm:$0xf]
    %v70 = vld [vmem:[#allocation2 + $0x4] sm:$0xf]
    %v71 = vld [vmem:[#allocation5] sm:$0xf]
    %v72 = vld [vmem:[#allocation5 + $0x4] sm:$0xf]
    %v73 = vld [vmem:[#allocation5 + $0x8] sm:$0xf]
    %v74 = vld [vmem:[#allocation5 + $0xc] sm:$0xf]
    %v75 = vld [vmem:[#allocation5 + $0x10] sm:$0xf]
    %v76 = vld [vmem:[#allocation5 + $0x14] sm:$0xf]
    %v77 = vld [vmem:[#allocation5 + $0x18] sm:$0xf]
    %v78 = vld [vmem:[#allocation5 + $0x1c] sm:$0xf]
    %v79 = vld [vmem:[#allocation5 + $0x20] sm:$0xf]
    %v80 = vld [vmem:[#allocation5 + $0x24] sm:$0xf]
    %v81 = vld [vmem:[#allocation5 + $0x28] sm:$0xf]
    %v82 = vld [vmem:[#allocation5 + $0x2c] sm:$0xf]
    %v83 = vld [vmem:[#allocation5 + $0x30] sm:$0xf]
    %v84 = vld [vmem:[#allocation5 + $0x34] sm:$0xf]
    %v85 = vld [vmem:[#allocation5 + $0x38] sm:$0xf]
    %v86 = vld [vmem:[#allocation5 + $0x3c] sm:$0xf]
    %v87 = vld [vmem:[%s2] sm:$0x1]
    %v89 = vlaneseq
    %v90 = vshrl.u32 %v89, 7
    %v91 = vsub.s32 0, %v90
    %v92 = vrot.slane %v87, %v91
    %v96 = vunpack.c.l.b16 %v69
    %v97 = vunpack.c.l.b16 %v70
    %v98 = vpack.c.b16 %v97, %v96
    %v116 = vunpack.c.l.b16 %v71
    %v117 = vunpack.c.l.b16 %v72
    %v118 = vunpack.c.l.b16 %v73
    %v119 = vunpack.c.l.b16 %v74
    %v120 = vunpack.c.l.b16 %v75
    %v121 = vunpack.c.l.b16 %v76
    %v122 = vunpack.c.l.b16 %v77
    %v123 = vunpack.c.l.b16 %v78
    %v124 = vunpack.c.l.b16 %v79
    %v125 = vunpack.c.l.b16 %v80
    %v126 = vunpack.c.l.b16 %v81
    %v127 = vunpack.c.l.b16 %v82
    %v128 = vunpack.c.l.b16 %v83
    %v129 = vunpack.c.l.b16 %v84
    %v130 = vunpack.c.l.b16 %v85
    %v131 = vunpack.c.l.b16 %v86
    %v132 = vpack.c.b16 %v117, %v116
    %v133 = vpack.c.b16 %v119, %v118
    %v134 = vpack.c.b16 %v121, %v120
    %v135 = vpack.c.b16 %v123, %v122
    %v136 = vpack.c.b16 %v125, %v124
    %v137 = vpack.c.b16 %v127, %v126
    %v138 = vpack.c.b16 %v129, %v128
    %v139 = vpack.c.b16 %v131, %v130
    %148 = vmatprep.subr.bf16.mxu0 0
    %149 = vmatpush1.bf16.msra.mxu0 %v132
    %150 = vmatprep.subr.bf16.mxu0 0
    %151 = vmatpush1.bf16.msra.mxu0 %v133
    %152 = vmatprep.subr.bf16.mxu0 0
    %153 = vmatpush1.bf16.msra.mxu0 %v134
    %154 = vmatprep.subr.bf16.mxu0 0
    %155 = vmatpush1.bf16.msra.mxu0 %v135
    %156 = vmatprep.subr.bf16.mxu0 0
    %157 = vmatpush1.bf16.msra.mxu0 %v136
    %158 = vmatprep.subr.bf16.mxu0 0
    %159 = vmatpush1.bf16.msra.mxu0 %v137
    %160 = vmatprep.subr.bf16.mxu0 0
    %161 = vmatpush1.bf16.msra.mxu0 %v138
    %162 = vmatprep.subr.bf16.mxu0 0
    %163 = vmatpush1.bf16.msra.mxu0 %v139
    %164 = vmatprep.subr.bf16.mxu0 0
    %165 = vmatpush1.bf16.msra.mxu0 0
    %166 = vmatprep.subr.bf16.mxu0 0
    %167 = vmatpush1.bf16.msra.mxu0 0
    %168 = vmatprep.subr.bf16.mxu0 0
    %169 = vmatpush1.bf16.msra.mxu0 0
    %170 = vmatprep.subr.bf16.mxu0 0
    %171 = vmatpush1.bf16.msra.mxu0 0
    %172 = vmatprep.subr.bf16.mxu0 0
    %173 = vmatpush1.bf16.msra.mxu0 0
    %174 = vmatprep.subr.bf16.mxu0 0
    %175 = vmatpush1.bf16.msra.mxu0 0
    %176 = vmatprep.subr.bf16.mxu0 0
    %177 = vmatpush1.bf16.msra.mxu0 0
    %178 = vmatprep.subr.bf16.mxu0 0
    %179 = vmatpush1.bf16.msra.mxu0 0
    %180 = vmatprep.mubr.bf16.mxu0 0
    %181 = vmatmul.mubr.bf16.gmra.mrb[0].mxu0 %v98
    %v182 = vpop.f32.mrb[0].mxu0
    %v183 = vadd.f32 %v92, %v182
    %v184 = vpop.f32.mrb[0].mxu0
    %v185 = vpop.f32.mrb[0].mxu0
    %v186 = vadd.f32 %v92, %v185
    %v187 = vpop.f32.mrb[0].mxu0
    %188 = vdwg.mxu0
    %v189 = vmax.f32 %v183, 0.0
    %v190 = vmax.f32 %v186, 0.0
    %v191 = vpack.c.bf16 %v190, %v189
    %v192 = vld [vmem:[#allocation7] sm:$0xf]
    %v193 = vld [vmem:[#allocation7 + $0x4] sm:$0xf]
    %v194 = vld [vmem:[#allocation7 + $0x8] sm:$0xf]
    %v195 = vld [vmem:[#allocation7 + $0xc] sm:$0xf]
    %v196 = vld [vmem:[#allocation7 + $0x10] sm:$0xf]
    %v197 = vld [vmem:[#allocation7 + $0x14] sm:$0xf]
    %v198 = vld [vmem:[#allocation7 + $0x18] sm:$0xf]
    %v199 = vld [vmem:[#allocation7 + $0x1c] sm:$0xf]
    %v200 = vld [vmem:[#allocation7 + $0x20] sm:$0xf]
    %v201 = vld [vmem:[#allocation7 + $0x24] sm:$0xf]
    %v202 = vld [vmem:[#allocation7 + $0x28] sm:$0xf]
    %v203 = vld [vmem:[#allocation7 + $0x2c] sm:$0xf]
    %v204 = vld [vmem:[#allocation7 + $0x30] sm:$0xf]
    %v205 = vld [vmem:[#allocation7 + $0x34] sm:$0xf]
    %v206 = vld [vmem:[#allocation7 + $0x38] sm:$0xf]
    %v207 = vld [vmem:[#allocation7 + $0x3c] sm:$0xf]
    %v208 = vld [vmem:[%s4] sm:$0x1]
    %v210 = vlaneseq
    %v211 = vshrl.u32 %v210, 7
    %v212 = vsub.s32 0, %v211
    %v213 = vrot.slane %v208, %v212
    %v231 = vunpack.c.l.b16 %v192
    %v232 = vunpack.c.l.b16 %v193
    %v233 = vunpack.c.l.b16 %v194
    %v234 = vunpack.c.l.b16 %v195
    %v235 = vunpack.c.l.b16 %v196
    %v236 = vunpack.c.l.b16 %v197
    %v237 = vunpack.c.l.b16 %v198
    %v238 = vunpack.c.l.b16 %v199
    %v239 = vunpack.c.l.b16 %v200
    %v240 = vunpack.c.l.b16 %v201
    %v241 = vunpack.c.l.b16 %v202
    %v242 = vunpack.c.l.b16 %v203
    %v243 = vunpack.c.l.b16 %v204
    %v244 = vunpack.c.l.b16 %v205
    %v245 = vunpack.c.l.b16 %v206
    %v246 = vunpack.c.l.b16 %v207
    %v247 = vpack.c.b16 %v232, %v231
    %v248 = vpack.c.b16 %v234, %v233
    %v249 = vpack.c.b16 %v236, %v235
    %v250 = vpack.c.b16 %v238, %v237
    %v251 = vpack.c.b16 %v240, %v239
    %v252 = vpack.c.b16 %v242, %v241
    %v253 = vpack.c.b16 %v244, %v243
    %v254 = vpack.c.b16 %v246, %v245
    %263 = vmatprep.subr.bf16.mxu0 0
    %264 = vmatpush1.bf16.msra.mxu0 %v247
    %265 = vmatprep.subr.bf16.mxu0 0
    %266 = vmatpush1.bf16.msra.mxu0 %v248
    %267 = vmatprep.subr.bf16.mxu0 0
    %268 = vmatpush1.bf16.msra.mxu0 %v249
    %269 = vmatprep.subr.bf16.mxu0 0
    %270 = vmatpush1.bf16.msra.mxu0 %v250
    %271 = vmatprep.subr.bf16.mxu0 0
    %272 = vmatpush1.bf16.msra.mxu0 %v251
    %273 = vmatprep.subr.bf16.mxu0 0
    %274 = vmatpush1.bf16.msra.mxu0 %v252
    %275 = vmatprep.subr.bf16.mxu0 0
    %276 = vmatpush1.bf16.msra.mxu0 %v253
    %277 = vmatprep.subr.bf16.mxu0 0
    %278 = vmatpush1.bf16.msra.mxu0 %v254
    %279 = vmatprep.subr.bf16.mxu0 0
    %280 = vmatpush1.bf16.msra.mxu0 0
    %281 = vmatprep.subr.bf16.mxu0 0
    %282 = vmatpush1.bf16.msra.mxu0 0
    %283 = vmatprep.subr.bf16.mxu0 0
    %284 = vmatpush1.bf16.msra.mxu0 0
    %285 = vmatprep.subr.bf16.mxu0 0
    %286 = vmatpush1.bf16.msra.mxu0 0
    %287 = vmatprep.subr.bf16.mxu0 0
    %288 = vmatpush1.bf16.msra.mxu0 0
    %289 = vmatprep.subr.bf16.mxu0 0
    %290 = vmatpush1.bf16.msra.mxu0 0
    %291 = vmatprep.subr.bf16.mxu0 0
    %292 = vmatpush1.bf16.msra.mxu0 0
    %293 = vmatprep.subr.bf16.mxu0 0
    %294 = vmatpush1.bf16.msra.mxu0 0
    %295 = vmatprep.mubr.bf16.mxu0 0
    %296 = vmatmul.mubr.bf16.gmra.mrb[0].mxu0 %v191
    %v297 = vpop.f32.mrb[0].mxu0
    %v298 = vadd.f32 %v213, %v297
    %v299 = vpop.f32.mrb[0].mxu0
    %v300 = vpop.f32.mrb[0].mxu0
    %v301 = vadd.f32 %v213, %v300
    %v302 = vpop.f32.mrb[0].mxu0
    %303 = vdwg.mxu0
    %v304 = vunpack.c.l.bf16 %v69
    %v305 = vunpack.c.l.bf16 %v70
    %v306 = vadd.f32 %v298, %v304
    %v307 = vadd.f32 %v301, %v305
    %308 = vadd.xlane.f32.xlu0 %v306
    %v309 = vpop.xlane.xlu0 %308
    %310 = vadd.xlane.f32.xlu0 %v307
    %v311 = vpop.xlane.xlu0 %310
    %v312 = vmul.f32 %v309, 0.03125
    %v313 = vmul.f32 %v311, 0.03125
    %v314 = vsub.f32 %v306, %v312
    %v315 = vsub.f32 %v307, %v313
    %v316 = vlaneseq
    %v317 = vand.u32 %v316, 127
    %vm318 = vcmp.lt.s32.totalorder %v317, 32
    %v319 = vsel %vm318, %v314, 0.0
    %v320 = vsel %vm318, %v315, 0.0
    %v321 = vmul.f32 %v319, %v319
    %v322 = vmul.f32 %v320, %v320
    %323 = vadd.xlane.f32.xlu0 %v321
    %v324 = vpop.xlane.xlu0 %323
    %325 = vadd.xlane.f32.xlu0 %v322
    %v326 = vpop.xlane.xlu0 %325
    %v327 = vmul.f32 %v324, 0.03125
    %v328 = vmul.f32 %v326, 0.03125
    %v329 = vadd.f32 %v327, 1e-06
    %v330 = vadd.f32 %v328, 1e-06
    %v331 = vrsqrt.pop %v329
    %v332 = vrsqrt.pop %v330
    %v333 = vmul.f32 %v319, %v331
    %v334 = vmul.f32 %v320, %v332
    %v335 = vld [vmem:[%s5] sm:$0x1]
    %v337 = vlaneseq
    %v338 = vshrl.u32 %v337, 7
    %v339 = vsub.s32 0, %v338
    %v340 = vrot.slane %v335, %v339
    %v342 = vmul.f32 %v333, %v340
    %v343 = vmul.f32 %v334, %v340
    %v344 = vld [vmem:[%s6] sm:$0x1]
    %v346 = vlaneseq
    %v347 = vshrl.u32 %v346, 7
    %v348 = vsub.s32 0, %v347
    %v349 = vrot.slane %v344, %v348
    %v351 = vadd.f32 %v342, %v349
    %v352 = vadd.f32 %v343, %v349
    %353 = vst [vmem:[#allocation8] sm:$0xff] %v351
    %354 = vst [vmem:[#allocation8 + $0x8] sm:$0xff] %v352
    // Predicated region
    $region42: #{tpu_custom_call.1} parent=1 // pred_check
      _
    $region43: #{tpu_custom_call.1} parent=1 // pred_check_branch
      %356 = sbr.rel (0) target = $region45
    $region44: #{tpu_custom_call.1} parent=1 // pred_region
      %s358 = ssub.s32 256, 256
      %359 = vsyncadd [#allocation4], %s358
      %s360 = sshll.u32 [#allocation8], 4
      %s361 = int_to_ptr.vmem [resolvable:$true] %s360
      %366 = dma.vmem_to_hbm [thread:$0]  %s361, 256, %s7, [#allocation4], 128, 128, 8
    $region45: #{tpu_custom_call.1} parent=1 // pred_fallthru
      _
    // Predicated region
    $region46: #{tpu_custom_call.1} parent=1 // pred_check
      _
    $region47: #{tpu_custom_call.1} parent=1 // pred_check_branch
      %368 = sbr.rel (0) target = $region49
    $region48: #{tpu_custom_call.1} parent=1 // pred_region
      %369 = dma.done [#allocation4], 256
    $region49: #{tpu_custom_call.1} parent=1 // pred_fallthru
      _
    %370 = vsyncpa [#allocation3], 1
    %371 = vsyncpa [#allocation6], 1
    %372 = vsyncpa [#allocation4], 1

// kernel: tpu_custom_call.1
$region0: #{tpu_custom_call.1}
  #allocation0 [shape = 'u32[]', space=smem, size = 0x4, offset = 0x4, fixed_abs, tag = 'smem constant byte address 0x4 - core index']
  #allocation1 [shape = 'u32[144,128]{1,0:T(1,128)}', space=vmem, size = 0x12000, scoped, tag = 'internal scratch']
  %s0 = inlined_call_operand.hbm [shape: bf16[16,128], index: 0, kind: input, shape index: {}]
  %s1 = inlined_call_operand.hbm [shape: bf16[128,128], index: 1, kind: input, shape index: {}]
  %s2 = inlined_call_operand.vmem [shape: f32[1,128], index: 2, kind: input, shape index: {}]
  %s3 = inlined_call_operand.hbm [shape: bf16[128,128], index: 3, kind: input, shape index: {}]
  %s4 = inlined_call_operand.vmem [shape: f32[1,128], index: 4, kind: input, shape index: {}]
  %s5 = inlined_call_operand.vmem [shape: f32[1,128], index: 5, kind: input, shape index: {}]
  %s6 = inlined_call_operand.vmem [shape: f32[1,128], index: 6, kind: input, shape index: {}]
  %s7 = inlined_call_operand.hbm [shape: f32[16,128], index: 7, kind: output, shape index: {}]
  %s8 = sld [smem:[#allocation0]]
  $region50: #{tpu_custom_call.1} parent=0
    _
  %s10 = ssub.s32 1, %s8
  %s11 = scalar_select 0, %s10, %s8
  $region1: #{tpu_custom_call.1} parent=0
    #allocation2 [shape = 'u8[4096]{0}', space=vmem, size = 0x1000, scoped, tag = 'input window, operand 0, single buffered']
    #allocation3 [shape = 's32[1]{0}', space=sflag, size = 0x4, scoped, tag = 'scoped memory for tpu_custom_call.1']
    #allocation4 [shape = 's32[1]{0}', space=sflag, size = 0x4, scoped, tag = 'scoped memory for tpu_custom_call.1']
    #allocation5 [shape = 'u8[32768]{0}', space=vmem, size = 0x8000, scoped, tag = 'input window, operand 1, single buffered']
    #allocation6 [shape = 's32[1]{0}', space=sflag, size = 0x4, scoped, tag = 'scoped memory for tpu_custom_call.1']
    #allocation7 [shape = 'u8[32768]{0}', space=vmem, size = 0x8000, scoped, tag = 'input window, operand 3, single buffered']
    #allocation8 [shape = 'u8[8192]{0}', space=vmem, size = 0x2000, scoped, tag = 'output window, operand 0, single buffered']
    %12 = vsyncpa [#allocation3], 0
    %13 = vsyncpa [#allocation6], 0
    %14 = vsyncpa [#allocation4], 0
    // Predicated region
    $region2: #{tpu_custom_call.1} parent=1 // pred_check
      _
    $region3: #{tpu_custom_call.1} parent=1 // pred_check_branch
      %16 = sbr.rel (0) target = $region5
    $region4: #{tpu_custom_call.1} parent=1 // pred_region
      %s18 = ssub.s32 128, 128
      %19 = vsyncadd [#allocation3], %s18
      %s20 = sshll.u32 [#allocation2], 4
      %s21 = int_to_ptr.vmem [resolvable:$true] %s20
      %26 = dma.hbm_to_vmem [thread:$0]  %s0, 128, %s21, [#allocation3], 64, 64, 4
    $region5: #{tpu_custom_call.1} parent=1 // pred_fallthru
      _
    // Predicated region
    $region6: #{tpu_custom_call.1} parent=1 // pred_check
      _
    $region7: #{tpu_custom_call.1} parent=1 // pred_check_branch
      %28 = sbr.rel (0) target = $region9
    $region8: #{tpu_custom_call.1} parent=1 // pred_region
      %s30 = ssub.s32 1024, 1024
      %31 = vsyncadd [#allocation6], %s30
      %s32 = sshll.u32 [#allocation5], 4
      %s33 = int_to_ptr.vmem [resolvable:$true] %s32
      %38 = dma.hbm_to_vmem [thread:$0]  %s1, 1024, %s33, [#allocation6], 64, 64, 4
    $region9: #{tpu_custom_call.1} parent=1 // pred_fallthru
      _
    // Predicated region
    $region10: #{tpu_custom_call.1} parent=1 // pred_check
      _
    $region11: #{tpu_custom_call.1} parent=1 // pred_check_branch
      %40 = sbr.rel (0) target = $region13
    $region12: #{tpu_custom_call.1} parent=1 // pred_region
      _
    $region13: #{tpu_custom_call.1} parent=1 // pred_fallthru
      _
    // Predicated region
    $region14: #{tpu_custom_call.1} parent=1 // pred_check
      _
    $region15: #{tpu_custom_call.1} parent=1 // pred_check_branch
      %42 = sbr.rel (0) target = $region17
    $region16: #{tpu_custom_call.1} parent=1 // pred_region
      %s44 = ssub.s32 1024, 1024
      %45 = vsyncadd [#allocation6], %s44
      %s46 = sshll.u32 [#allocation7], 4
      %s47 = int_to_ptr.vmem [resolvable:$true] %s46
      %52 = dma.hbm_to_vmem [thread:$0]  %s3, 1024, %s47, [#allocation6], 64, 64, 4
    $region17: #{tpu_custom_call.1} parent=1 // pred_fallthru
      _
    // Predicated region
    $region18: #{tpu_custom_call.1} parent=1 // pred_check
      _
    $region19: #{tpu_custom_call.1} parent=1 // pred_check_branch
      %54 = sbr.rel (0) target = $region21
    $region20: #{tpu_custom_call.1} parent=1 // pred_region
      _
    $region21: #{tpu_custom_call.1} parent=1 // pred_fallthru
      _
    // Predicated region
    $region22: #{tpu_custom_call.1} parent=1 // pred_check
      _
    $region23: #{tpu_custom_call.1} parent=1 // pred_check_branch
      %56 = sbr.rel (0) target = $region25
    $region24: #{tpu_custom_call.1} parent=1 // pred_region
      _
    $region25: #{tpu_custom_call.1} parent=1 // pred_fallthru
      _
    // Predicated region
    $region26: #{tpu_custom_call.1} parent=1 // pred_check
      _
    $region27: #{tpu_custom_call.1} parent=1 // pred_check_branch
      %58 = sbr.rel (0) target = $region29
    $region28: #{tpu_custom_call.1} parent=1 // pred_region
      _
    $region29: #{tpu_custom_call.1} parent=1 // pred_fallthru
      _
    // Predicated region
    $region30: #{tpu_custom_call.1} parent=1 // pred_check
      _
    $region31: #{tpu_custom_call.1} parent=1 // pred_check_branch
      %60 = sbr.rel (0) target = $region33
    $region32: #{tpu_custom_call.1} parent=1 // pred_region
      %61 = dma.done [#allocation3], 128
    $region33: #{tpu_custom_call.1} parent=1 // pred_fallthru
      _
    // Predicated region
    $region34: #{tpu_custom_call.1} parent=1 // pred_check
      _
    $region35: #{tpu_custom_call.1} parent=1 // pred_check_branch
      %63 = sbr.rel (0) target = $region37
    $region36: #{tpu_custom_call.1} parent=1 // pred_region
      %64 = dma.done [#allocation6], 1024
    $region37: #{tpu_custom_call.1} parent=1 // pred_fallthru
      _
    // Predicated region
    $region38: #{tpu_custom_call.1} parent=1 // pred_check
      _
    $region39: #{tpu_custom_call.1} parent=1 // pred_check_branch
      %66 = sbr.rel (0) target = $region41
    $region40: #{tpu_custom_call.1} parent=1 // pred_region
      %67 = dma.done [#allocation6], 1024
    $region41: #{tpu_custom_call.1} parent=1 // pred_fallthru
      _
    %v69 = vld [vmem:[#allocation2] sm:$0xf]
    %v70 = vld [vmem:[#allocation2 + $0x4] sm:$0xf]
    %v71 = vld [vmem:[#allocation5] sm:$0xf]
    %v72 = vld [vmem:[#allocation5 + $0x4] sm:$0xf]
    %v73 = vld [vmem:[#allocation5 + $0x8] sm:$0xf]
    %v74 = vld [vmem:[#allocation5 + $0xc] sm:$0xf]
    %v75 = vld [vmem:[#allocation5 + $0x10] sm:$0xf]
    %v76 = vld [vmem:[#allocation5 + $0x14] sm:$0xf]
    %v77 = vld [vmem:[#allocation5 + $0x18] sm:$0xf]
    %v78 = vld [vmem:[#allocation5 + $0x1c] sm:$0xf]
    %v79 = vld [vmem:[#allocation5 + $0x20] sm:$0xf]
    %v80 = vld [vmem:[#allocation5 + $0x24] sm:$0xf]
    %v81 = vld [vmem:[#allocation5 + $0x28] sm:$0xf]
    %v82 = vld [vmem:[#allocation5 + $0x2c] sm:$0xf]
    %v83 = vld [vmem:[#allocation5 + $0x30] sm:$0xf]
    %v84 = vld [vmem:[#allocation5 + $0x34] sm:$0xf]
    %v85 = vld [vmem:[#allocation5 + $0x38] sm:$0xf]
    %v86 = vld [vmem:[#allocation5 + $0x3c] sm:$0xf]
    %v87 = vld [vmem:[%s2] sm:$0x1]
    %v89 = vlaneseq
    %v90 = vshrl.u32 %v89, 7
    %v91 = vsub.s32 0, %v90
    %v92 = vrot.slane %v87, %v91
    %v96 = vunpack.c.l.b16 %v69
    %v97 = vunpack.c.l.b16 %v70
    %v98 = vpack.c.b16 %v97, %v96
    %v116 = vunpack.c.l.b16 %v71
    %v117 = vunpack.c.l.b16 %v72
    %v118 = vunpack.c.l.b16 %v73
    %v119 = vunpack.c.l.b16 %v74
    %v120 = vunpack.c.l.b16 %v75
    %v121 = vunpack.c.l.b16 %v76
    %v122 = vunpack.c.l.b16 %v77
    %v123 = vunpack.c.l.b16 %v78
    %v124 = vunpack.c.l.b16 %v79
    %v125 = vunpack.c.l.b16 %v80
    %v126 = vunpack.c.l.b16 %v81
    %v127 = vunpack.c.l.b16 %v82
    %v128 = vunpack.c.l.b16 %v83
    %v129 = vunpack.c.l.b16 %v84
    %v130 = vunpack.c.l.b16 %v85
    %v131 = vunpack.c.l.b16 %v86
    %v132 = vpack.c.b16 %v117, %v116
    %v133 = vpack.c.b16 %v119, %v118
    %v134 = vpack.c.b16 %v121, %v120
    %v135 = vpack.c.b16 %v123, %v122
    %v136 = vpack.c.b16 %v125, %v124
    %v137 = vpack.c.b16 %v127, %v126
    %v138 = vpack.c.b16 %v129, %v128
    %v139 = vpack.c.b16 %v131, %v130
    %148 = vmatprep.subr.bf16.mxu0 0
    %149 = vmatpush1.bf16.msra.mxu0 %v132
    %150 = vmatprep.subr.bf16.mxu0 0
    %151 = vmatpush1.bf16.msra.mxu0 %v133
    %152 = vmatprep.subr.bf16.mxu0 0
    %153 = vmatpush1.bf16.msra.mxu0 %v134
    %154 = vmatprep.subr.bf16.mxu0 0
    %155 = vmatpush1.bf16.msra.mxu0 %v135
    %156 = vmatprep.subr.bf16.mxu0 0
    %157 = vmatpush1.bf16.msra.mxu0 %v136
    %158 = vmatprep.subr.bf16.mxu0 0
    %159 = vmatpush1.bf16.msra.mxu0 %v137
    %160 = vmatprep.subr.bf16.mxu0 0
    %161 = vmatpush1.bf16.msra.mxu0 %v138
    %162 = vmatprep.subr.bf16.mxu0 0
    %163 = vmatpush1.bf16.msra.mxu0 %v139
    %164 = vmatprep.subr.bf16.mxu0 0
    %165 = vmatpush1.bf16.msra.mxu0 0
    %166 = vmatprep.subr.bf16.mxu0 0
    %167 = vmatpush1.bf16.msra.mxu0 0
    %168 = vmatprep.subr.bf16.mxu0 0
    %169 = vmatpush1.bf16.msra.mxu0 0
    %170 = vmatprep.subr.bf16.mxu0 0
    %171 = vmatpush1.bf16.msra.mxu0 0
    %172 = vmatprep.subr.bf16.mxu0 0
    %173 = vmatpush1.bf16.msra.mxu0 0
    %174 = vmatprep.subr.bf16.mxu0 0
    %175 = vmatpush1.bf16.msra.mxu0 0
    %176 = vmatprep.subr.bf16.mxu0 0
    %177 = vmatpush1.bf16.msra.mxu0 0
    %178 = vmatprep.subr.bf16.mxu0 0
    %179 = vmatpush1.bf16.msra.mxu0 0
    %180 = vmatprep.mubr.bf16.mxu0 0
    %181 = vmatmul.mubr.bf16.gmra.mrb[0].mxu0 %v98
    %v182 = vpop.f32.mrb[0].mxu0
    %v183 = vadd.f32 %v92, %v182
    %v184 = vpop.f32.mrb[0].mxu0
    %v185 = vpop.f32.mrb[0].mxu0
    %v186 = vadd.f32 %v92, %v185
    %v187 = vpop.f32.mrb[0].mxu0
    %188 = vdwg.mxu0
    %v189 = vmax.f32 %v183, 0.0
    %v190 = vmax.f32 %v186, 0.0
    %v191 = vpack.c.bf16 %v190, %v189
    %v192 = vld [vmem:[#allocation7] sm:$0xf]
    %v193 = vld [vmem:[#allocation7 + $0x4] sm:$0xf]
    %v194 = vld [vmem:[#allocation7 + $0x8] sm:$0xf]
    %v195 = vld [vmem:[#allocation7 + $0xc] sm:$0xf]
    %v196 = vld [vmem:[#allocation7 + $0x10] sm:$0xf]
    %v197 = vld [vmem:[#allocation7 + $0x14] sm:$0xf]
    %v198 = vld [vmem:[#allocation7 + $0x18] sm:$0xf]
    %v199 = vld [vmem:[#allocation7 + $0x1c] sm:$0xf]
    %v200 = vld [vmem:[#allocation7 + $0x20] sm:$0xf]
    %v201 = vld [vmem:[#allocation7 + $0x24] sm:$0xf]
    %v202 = vld [vmem:[#allocation7 + $0x28] sm:$0xf]
    %v203 = vld [vmem:[#allocation7 + $0x2c] sm:$0xf]
    %v204 = vld [vmem:[#allocation7 + $0x30] sm:$0xf]
    %v205 = vld [vmem:[#allocation7 + $0x34] sm:$0xf]
    %v206 = vld [vmem:[#allocation7 + $0x38] sm:$0xf]
    %v207 = vld [vmem:[#allocation7 + $0x3c] sm:$0xf]
    %v208 = vld [vmem:[%s4] sm:$0x1]
    %v210 = vlaneseq
    %v211 = vshrl.u32 %v210, 7
    %v212 = vsub.s32 0, %v211
    %v213 = vrot.slane %v208, %v212
    %v231 = vunpack.c.l.b16 %v192
    %v232 = vunpack.c.l.b16 %v193
    %v233 = vunpack.c.l.b16 %v194
    %v234 = vunpack.c.l.b16 %v195
    %v235 = vunpack.c.l.b16 %v196
    %v236 = vunpack.c.l.b16 %v197
    %v237 = vunpack.c.l.b16 %v198
    %v238 = vunpack.c.l.b16 %v199
    %v239 = vunpack.c.l.b16 %v200
    %v240 = vunpack.c.l.b16 %v201
    %v241 = vunpack.c.l.b16 %v202
    %v242 = vunpack.c.l.b16 %v203
    %v243 = vunpack.c.l.b16 %v204
    %v244 = vunpack.c.l.b16 %v205
    %v245 = vunpack.c.l.b16 %v206
    %v246 = vunpack.c.l.b16 %v207
    %v247 = vpack.c.b16 %v232, %v231
    %v248 = vpack.c.b16 %v234, %v233
    %v249 = vpack.c.b16 %v236, %v235
    %v250 = vpack.c.b16 %v238, %v237
    %v251 = vpack.c.b16 %v240, %v239
    %v252 = vpack.c.b16 %v242, %v241
    %v253 = vpack.c.b16 %v244, %v243
    %v254 = vpack.c.b16 %v246, %v245
    %263 = vmatprep.subr.bf16.mxu0 0
    %264 = vmatpush1.bf16.msra.mxu0 %v247
    %265 = vmatprep.subr.bf16.mxu0 0
    %266 = vmatpush1.bf16.msra.mxu0 %v248
    %267 = vmatprep.subr.bf16.mxu0 0
    %268 = vmatpush1.bf16.msra.mxu0 %v249
    %269 = vmatprep.subr.bf16.mxu0 0
    %270 = vmatpush1.bf16.msra.mxu0 %v250
    %271 = vmatprep.subr.bf16.mxu0 0
    %272 = vmatpush1.bf16.msra.mxu0 %v251
    %273 = vmatprep.subr.bf16.mxu0 0
    %274 = vmatpush1.bf16.msra.mxu0 %v252
    %275 = vmatprep.subr.bf16.mxu0 0
    %276 = vmatpush1.bf16.msra.mxu0 %v253
    %277 = vmatprep.subr.bf16.mxu0 0
    %278 = vmatpush1.bf16.msra.mxu0 %v254
    %279 = vmatprep.subr.bf16.mxu0 0
    %280 = vmatpush1.bf16.msra.mxu0 0
    %281 = vmatprep.subr.bf16.mxu0 0
    %282 = vmatpush1.bf16.msra.mxu0 0
    %283 = vmatprep.subr.bf16.mxu0 0
    %284 = vmatpush1.bf16.msra.mxu0 0
    %285 = vmatprep.subr.bf16.mxu0 0
    %286 = vmatpush1.bf16.msra.mxu0 0
    %287 = vmatprep.subr.bf16.mxu0 0
    %288 = vmatpush1.bf16.msra.mxu0 0
    %289 = vmatprep.subr.bf16.mxu0 0
    %290 = vmatpush1.bf16.msra.mxu0 0
    %291 = vmatprep.subr.bf16.mxu0 0
    %292 = vmatpush1.bf16.msra.mxu0 0
    %293 = vmatprep.subr.bf16.mxu0 0
    %294 = vmatpush1.bf16.msra.mxu0 0
    %295 = vmatprep.mubr.bf16.mxu0 0
    %296 = vmatmul.mubr.bf16.gmra.mrb[0].mxu0 %v191
    %v297 = vpop.f32.mrb[0].mxu0
    %v298 = vadd.f32 %v213, %v297
    %v299 = vpop.f32.mrb[0].mxu0
    %v300 = vpop.f32.mrb[0].mxu0
    %v301 = vadd.f32 %v213, %v300
    %v302 = vpop.f32.mrb[0].mxu0
    %303 = vdwg.mxu0
    %v304 = vunpack.c.l.bf16 %v69
    %v305 = vunpack.c.l.bf16 %v70
    %v306 = vadd.f32 %v298, %v304
    %v307 = vadd.f32 %v301, %v305
    %308 = vadd.xlane.f32.xlu0 %v306
    %v309 = vpop.xlane.xlu0 %308
    %310 = vadd.xlane.f32.xlu0 %v307
    %v311 = vpop.xlane.xlu0 %310
    %v312 = vmul.f32 %v309, 0.03125
    %v313 = vmul.f32 %v311, 0.03125
    %v314 = vsub.f32 %v306, %v312
    %v315 = vsub.f32 %v307, %v313
    %v316 = vlaneseq
    %v317 = vand.u32 %v316, 127
    %vm318 = vcmp.lt.s32.totalorder %v317, 32
    %v319 = vsel %vm318, %v314, 0.0
    %v320 = vsel %vm318, %v315, 0.0
    %v321 = vmul.f32 %v319, %v319
    %v322 = vmul.f32 %v320, %v320
    %323 = vadd.xlane.f32.xlu0 %v321
    %v324 = vpop.xlane.xlu0 %323
    %325 = vadd.xlane.f32.xlu0 %v322
    %v326 = vpop.xlane.xlu0 %325
    %v327 = vmul.f32 %v324, 0.03125
    %v328 = vmul.f32 %v326, 0.03125
    %v329 = vadd.f32 %v327, 1e-06
    %v330 = vadd.f32 %v328, 1e-06
    %v331 = vrsqrt.pop %v329
    %v332 = vrsqrt.pop %v330
    %v333 = vmul.f32 %v319, %v331
    %v334 = vmul.f32 %v320, %v332
    %v335 = vld [vmem:[%s5] sm:$0x1]
    %v337 = vlaneseq
    %v338 = vshrl.u32 %v337, 7
    %v339 = vsub.s32 0, %v338
    %v340 = vrot.slane %v335, %v339
    %v342 = vmul.f32 %v333, %v340
    %v343 = vmul.f32 %v334, %v340
    %v344 = vld [vmem:[%s6] sm:$0x1]
    %v346 = vlaneseq
    %v347 = vshrl.u32 %v346, 7
    %v348 = vsub.s32 0, %v347
    %v349 = vrot.slane %v344, %v348
    %v351 = vadd.f32 %v342, %v349
    %v352 = vadd.f32 %v343, %v349
    %353 = vst [vmem:[#allocation8] sm:$0xff] %v351
    %354 = vst [vmem:[#allocation8 + $0x8] sm:$0xff] %v352
    // Predicated region
    $region42: #{tpu_custom_call.1} parent=1 // pred_check
      _
    $region43: #{tpu_custom_call.1} parent=1 // pred_check_branch
      %356 = sbr.rel (0) target = $region45
    $region44: #{tpu_custom_call.1} parent=1 // pred_region
      %s358 = ssub.s32 256, 256
      %359 = vsyncadd [#allocation4], %s358
      %s360 = sshll.u32 [#allocation8], 4
      %s361 = int_to_ptr.vmem [resolvable:$true] %s360
      %366 = dma.vmem_to_hbm [thread:$0]  %s361, 256, %s7, [#allocation4], 128, 128, 8
    $region45: #{tpu_custom_call.1} parent=1 // pred_fallthru
      _
    // Predicated region
    $region46: #{tpu_custom_call.1} parent=1 // pred_check
      _
    $region47: #{tpu_custom_call.1} parent=1 // pred_check_branch
      %368 = sbr.rel (0) target = $region49
    $region48: #{tpu_custom_call.1} parent=1 // pred_region
      %369 = dma.done [#allocation4], 256
    $region49: #{tpu_custom_call.1} parent=1 // pred_fallthru
      _
    %370 = vsyncpa [#allocation3], 1
    %371 = vsyncpa [#allocation6], 1
    %372 = vsyncpa [#allocation4], 1

</llo_original>
